<compile_context>
chip_gen: v5e
topology: v5e:2x2
jax: 0.10.0
libtpu: 0.0.40
codegen_flags: <defaults>
</compile_context>

<pallas_src>
import jax
import jax.numpy as jnp
from jax.experimental import pallas as pl
from jax.experimental.pallas import tpu as pltpu

_D_IN = 784          # 28 * 28
_H1 = 128
_H2 = 64
_N_OUT = 10
_N_OUT_PAD = 128     # lane-dense output block (zero-padded logits)
_SUB = 8             # f32 sublane granularity for the batch tile


def _round_up(n, m):
    return ((n + m - 1) // m) * m


def _mlp_kernel(x_ref, w1_ref, b1_ref, w2_ref, b2_ref, w3_ref, b3_ref, o_ref):
    # x arrives as the original f32 rows; the (optional) bf16 cast happens here in
    # VMEM where it is hidden under the x DMA. With f32 weights it is a no-op.
    x = x_ref[...].astype(w1_ref.dtype)
    # Layer 1: (TB, 784) @ (784, 128) + (1, 128), ReLU. Mosaic lane-pads K=784
    # internally; accumulation is f32 on the MXU.
    h1 = jnp.dot(x, w1_ref[...], preferred_element_type=jnp.float32)
    h1 = jnp.maximum(h1 + b1_ref[...], 0.0)
    # Layer 2: (TB, 128) @ (128, 64) + (1, 64), ReLU
    h2 = jnp.dot(h1.astype(w2_ref.dtype), w2_ref[...],
                 preferred_element_type=jnp.float32)
    h2 = jnp.maximum(h2 + b2_ref[...], 0.0)
    # Layer 3 (logits, lane-padded to 128): (TB, 64) @ (64, 128) + (1, 128)
    h3 = jnp.dot(h2.astype(w3_ref.dtype), w3_ref[...],
                 preferred_element_type=jnp.float32)
    o_ref[...] = (h3 + b3_ref[...]).astype(o_ref.dtype)


def fractional_mlp_forward(x_nchw, kernel_params, *, tile_b=2048, pad_output=False):
    """x_nchw: (B, 1, 28, 28) float32 -> logits.

    kernel_params come from prepare_params(). Returns (B, 10) f32 logits by
    default; with pad_output=True returns the lane-dense (B, 128) logits (columns
    >= 10 are exactly zero) so downstream consumers can skip the slice pass.
    """
    w1t, b1, w2t, b2, w3t, b3 = kernel_params
    B = x_nchw.shape[0]

    # nn.Flatten: row-major flatten of all dims after batch. For contiguous NCHW
    # input this is a metadata-only reshape — no extra HBM pass, no cast, no pad.
    x = x_nchw.reshape(B, -1)
    d_in = x.shape[1]
    assert d_in == _D_IN and w1t.shape[0] == _D_IN
    n_out_pad = w3t.shape[1]

    # Batch tile: as large as possible (amortizes the ~0.35 us grid-step overhead
    # and fills the MXU), but never larger than the sublane-rounded batch, and for
    # big batches capped so the grid has >= 4 steps (v7x megacore sharding of the
    # "parallel" batch axis).
    tile_b_eff = max(_SUB, min(tile_b, _round_up(B, _SUB)))
    if B >= 1024:
        tile_b_eff = min(tile_b_eff, _round_up(pl.cdiv(B, 4), _SUB))

    # Ragged last block: Pallas masks out-of-bounds output rows; the garbage rows
    # read into the last x tile only feed rows that are never written.
    grid = (pl.cdiv(B, tile_b_eff),)

    out = pl.pallas_call(
        _mlp_kernel,
        out_shape=jax.ShapeDtypeStruct((B, n_out_pad), jnp.float32),
        grid_spec=pltpu.PrefetchScalarGridSpec(
            num_scalar_prefetch=0,
            grid=grid,
            in_specs=[
                # activations: tiled over batch, full 784-wide feature rows
                pl.BlockSpec((tile_b_eff, d_in), lambda i: (i, 0)),
                # weights / biases: full-array blocks, resident across the grid
                pl.BlockSpec(w1t.shape, lambda i: (0, 0)),
                pl.BlockSpec(b1.shape, lambda i: (0, 0)),
                pl.BlockSpec(w2t.shape, lambda i: (0, 0)),
                pl.BlockSpec(b2.shape, lambda i: (0, 0)),
                pl.BlockSpec(w3t.shape, lambda i: (0, 0)),
                pl.BlockSpec(b3.shape, lambda i: (0, 0)),
            ],
            # lane-dense (128-wide) output block -> unmasked, aligned stores
            out_specs=pl.BlockSpec((tile_b_eff, n_out_pad), lambda i: (i, 0)),
        ),
        compiler_params=pltpu.CompilerParams(
            dimension_semantics=("parallel",),
            vmem_limit_bytes=32 * 1024 * 1024,
        ),
    )(x, w1t, b1, w2t, b2, w3t, b3)

    if pad_output:
        return out
    # Column slice only (no batch padding to strip). Jit this forward together
    # with its consumer so the slice fuses instead of adding another HBM pass.
    return out[:, :_N_OUT]


def init_params(key):
    """Deterministic init matching SafeFractionalLinear: W ~ randn*0.05, b = 0.
    Returned in kernel-friendly transposed layout (in, out); biases as (1, out)."""
    k1, k2, k3 = jax.random.split(key, 3)
    w1 = jax.random.normal(k1, (_H1, _D_IN), jnp.float32) * 0.05   # torch (out, in)
    w2 = jax.random.normal(k2, (_H2, _H1), jnp.float32) * 0.05
    w3 = jax.random.normal(k3, (_N_OUT, _H2), jnp.float32) * 0.05
    b1 = jnp.zeros((1, _H1), jnp.float32)
    b2 = jnp.zeros((1, _H2), jnp.float32)
    b3 = jnp.zeros((1, _N_OUT), jnp.float32)
    return (w1.T, b1, w2.T, b2, w3.T, b3)


def prepare_params(params, *, use_bf16=False):
    """Kernel layout: pad logits 10 -> 128 (zero W3 columns / zero b3 entries) for
    lane-dense output stores (exact). Optionally store the *weights* in bf16
    (biases stay f32; x stays f32 in HBM and accumulation is always f32)."""
    w1t, b1, w2t, b2, w3t, b3 = params
    w3t_p = jnp.pad(w3t, ((0, 0), (0, _N_OUT_PAD - w3t.shape[1])))
    b3_p = jnp.pad(b3, ((0, 0), (0, _N_OUT_PAD - b3.shape[1])))
    wdt = jnp.bfloat16 if use_bf16 else jnp.float32
    return (w1t.astype(wdt), b1.astype(jnp.float32),
            w2t.astype(wdt), b2.astype(jnp.float32),
            w3t_p.astype(wdt), b3_p.astype(jnp.float32))


def reference_forward(x_nchw, params):
    """Pure-JAX reference of the same math for the correctness check."""
    w1t, b1, w2t, b2, w3t, b3 = params
    x = x_nchw.reshape(x_nchw.shape[0], -1).astype(jnp.float32)
    h1 = jnp.maximum(x @ w1t + b1, 0.0)
    h2 = jnp.maximum(h1 @ w2t + b2, 0.0)
    return h2 @ w3t + b3


if __name__ == "__main__":
    key = jax.random.PRNGKey(0)
    pkey, xkey = jax.random.split(key)
    params = init_params(pkey)

    # MNIST-like input: NCHW (B, 1, 28, 28) -> flatten gives 784 features.
    B = 16
    x = jax.random.normal(xkey, (B, 1, 28, 28), jnp.float32)

    fwd = jax.jit(fractional_mlp_forward)

    # f32 path: matches the (eval-mode) torch forward / pure-JAX reference.
    kparams = prepare_params(params, use_bf16=False)
    out = jax.block_until_ready(fwd(x, kparams))
    ref = jax.block_until_ready(reference_forward(x, params))
    assert out.shape == (B, 10), out.shape
    assert jnp.allclose(out, ref, atol=1e-4, rtol=1e-4), "mismatch vs JAX reference"

    # bf16-weight perf path (optional): smoke-test that it compiles and runs.
    kparams_bf16 = prepare_params(params, use_bf16=True)
    out_bf16 = jax.block_until_ready(fwd(x, kparams_bf16))
    assert out_bf16.shape == (B, 10)
    assert bool(jnp.all(jnp.isfinite(out_bf16)))

    # Padded-output path (consumer reads only the first 10 columns; skips the
    # standalone slice pass).
    out_pad = jax.block_until_ready(
        jax.jit(lambda a, p: fractional_mlp_forward(a, p, pad_output=True))(x, kparams))
    assert out_pad.shape == (B, _N_OUT_PAD)
    assert jnp.allclose(out_pad[:, :_N_OUT], ref, atol=1e-4, rtol=1e-4)

    print("KERNEL_OK")
</pallas_src>

<mosaic_0001>
module attributes {stable_mosaic.version = 11 : i64} {
  func.func @_mlp_kernel(%arg0: i32, %arg1: memref<16x784xf32, #tpu.memory_space<vmem>>, %arg2: memref<784x128xf32, #tpu.memory_space<vmem>>, %arg3: memref<1x128xf32, #tpu.memory_space<vmem>>, %arg4: memref<128x64xf32, #tpu.memory_space<vmem>>, %arg5: memref<1x64xf32, #tpu.memory_space<vmem>>, %arg6: memref<64x128xf32, #tpu.memory_space<vmem>>, %arg7: memref<1x128xf32, #tpu.memory_space<vmem>>, %arg8: memref<16x128xf32, #tpu.memory_space<vmem>>) attributes {dimension_semantics = [#tpu.dimension_semantics<parallel>], iteration_bounds = array<i64: 1>, scalar_prefetch = 0 : i64, scratch_operands = 0 : i64, tpu.core_type = #tpu.core_type<tc>, window_params = [{transform_indices = @transform_0, window_bounds = array<i64: 16, 784>}, {pipeline_mode = #tpu.pipeline_mode<synchronous>, transform_indices = @transform_1, window_bounds = array<i64: 784, 128>}, {pipeline_mode = #tpu.pipeline_mode<synchronous>, transform_indices = @transform_2, window_bounds = array<i64: 1, 128>}, {pipeline_mode = #tpu.pipeline_mode<synchronous>, transform_indices = @transform_3, window_bounds = array<i64: 128, 64>}, {pipeline_mode = #tpu.pipeline_mode<synchronous>, transform_indices = @transform_4, window_bounds = array<i64: 1, 64>}, {pipeline_mode = #tpu.pipeline_mode<synchronous>, transform_indices = @transform_5, window_bounds = array<i64: 64, 128>}, {pipeline_mode = #tpu.pipeline_mode<synchronous>, transform_indices = @transform_6, window_bounds = array<i64: 1, 128>}, {transform_indices = @transform_7, window_bounds = array<i64: 16, 128>}]} {
    %c0 = arith.constant 0 : index
    %c0_0 = arith.constant 0 : index
    %0 = vector.load %arg1[%c0, %c0_0] : memref<16x784xf32, #tpu.memory_space<vmem>>, vector<16x784xf32>
    %c0_1 = arith.constant 0 : index
    %c0_2 = arith.constant 0 : index
    %1 = vector.load %arg2[%c0_1, %c0_2] : memref<784x128xf32, #tpu.memory_space<vmem>>, vector<784x128xf32>
    %cst = arith.constant dense<0.000000e+00> : vector<16x128xf32>
    %2 = tpu.matmul %0, %1, %cst {dimension_numbers = #tpu.dot_dimension_numbers<[1], [0], [0], [1], [0, 0, 1, 1], [], []>} : vector<16x784xf32>, vector<784x128xf32>, vector<16x128xf32> -> vector<16x128xf32>
    %c0_3 = arith.constant 0 : index
    %c0_4 = arith.constant 0 : index
    %3 = vector.load %arg3[%c0_3, %c0_4] : memref<1x128xf32, #tpu.memory_space<vmem>>, vector<1x128xf32>
    %4 = vector.broadcast %3 : vector<1x128xf32> to vector<16x128xf32>
    %5 = arith.addf %2, %4 : vector<16x128xf32>
    %cst_5 = arith.constant 0.000000e+00 : f32
    %6 = vector.broadcast %cst_5 : f32 to vector<16x128xf32>
    %7 = arith.maximumf %5, %6 : vector<16x128xf32>
    %c0_6 = arith.constant 0 : index
    %c0_7 = arith.constant 0 : index
    %8 = vector.load %arg4[%c0_6, %c0_7] : memref<128x64xf32, #tpu.memory_space<vmem>>, vector<128x64xf32>
    %cst_8 = arith.constant dense<0.000000e+00> : vector<16x64xf32>
    %9 = tpu.matmul %7, %8, %cst_8 {dimension_numbers = #tpu.dot_dimension_numbers<[1], [0], [0], [1], [0, 0, 1, 1], [], []>} : vector<16x128xf32>, vector<128x64xf32>, vector<16x64xf32> -> vector<16x64xf32>
    %c0_9 = arith.constant 0 : index
    %c0_10 = arith.constant 0 : index
    %10 = vector.load %arg5[%c0_9, %c0_10] : memref<1x64xf32, #tpu.memory_space<vmem>>, vector<1x64xf32>
    %11 = vector.broadcast %10 : vector<1x64xf32> to vector<16x64xf32>
    %12 = arith.addf %9, %11 : vector<16x64xf32>
    %cst_11 = arith.constant 0.000000e+00 : f32
    %13 = vector.broadcast %cst_11 : f32 to vector<16x64xf32>
    %14 = arith.maximumf %12, %13 : vector<16x64xf32>
    %c0_12 = arith.constant 0 : index
    %c0_13 = arith.constant 0 : index
    %15 = vector.load %arg6[%c0_12, %c0_13] : memref<64x128xf32, #tpu.memory_space<vmem>>, vector<64x128xf32>
    %cst_14 = arith.constant dense<0.000000e+00> : vector<16x128xf32>
    %16 = tpu.matmul %14, %15, %cst_14 {dimension_numbers = #tpu.dot_dimension_numbers<[1], [0], [0], [1], [0, 0, 1, 1], [], []>} : vector<16x64xf32>, vector<64x128xf32>, vector<16x128xf32> -> vector<16x128xf32>
    %c0_15 = arith.constant 0 : index
    %c0_16 = arith.constant 0 : index
    %17 = vector.load %arg7[%c0_15, %c0_16] : memref<1x128xf32, #tpu.memory_space<vmem>>, vector<1x128xf32>
    %18 = vector.broadcast %17 : vector<1x128xf32> to vector<16x128xf32>
    %19 = arith.addf %16, %18 : vector<16x128xf32>
    %c0_17 = arith.constant 0 : index
    %c0_18 = arith.constant 0 : index
    %20 = vector.load %arg8[%c0_17, %c0_18] : memref<16x128xf32, #tpu.memory_space<vmem>>, vector<16x128xf32>
    tpu.vector_store %arg8[%c0_17, %c0_18], %19 {strides = array<i32>} : memref<16x128xf32, #tpu.memory_space<vmem>>, vector<16x128xf32>,
    return
  }
  func.func @transform_0(%arg0: i32) -> (i32, i32) {
    %c0_i32 = arith.constant 0 : i32
    %c0_i32_0 = arith.constant 0 : i32
    return %arg0, %c0_i32 : i32, i32
  }
  func.func @transform_1(%arg0: i32) -> (i32, i32) {
    %c0_i32 = arith.constant 0 : i32
    %c0_i32_0 = arith.constant 0 : i32
    %c0_i32_1 = arith.constant 0 : i32
    return %c0_i32, %c0_i32_0 : i32, i32
  }
  func.func @transform_2(%arg0: i32) -> (i32, i32) {
    %c0_i32 = arith.constant 0 : i32
    %c0_i32_0 = arith.constant 0 : i32
    %c0_i32_1 = arith.constant 0 : i32
    return %c0_i32, %c0_i32_0 : i32, i32
  }
  func.func @transform_3(%arg0: i32) -> (i32, i32) {
    %c0_i32 = arith.constant 0 : i32
    %c0_i32_0 = arith.constant 0 : i32
    %c0_i32_1 = arith.constant 0 : i32
    return %c0_i32, %c0_i32_0 : i32, i32
  }
  func.func @transform_4(%arg0: i32) -> (i32, i32) {
    %c0_i32 = arith.constant 0 : i32
    %c0_i32_0 = arith.constant 0 : i32
    %c0_i32_1 = arith.constant 0 : i32
    return %c0_i32, %c0_i32_0 : i32, i32
  }
  func.func @transform_5(%arg0: i32) -> (i32, i32) {
    %c0_i32 = arith.constant 0 : i32
    %c0_i32_0 = arith.constant 0 : i32
    %c0_i32_1 = arith.constant 0 : i32
    return %c0_i32, %c0_i32_0 : i32, i32
  }
  func.func @transform_6(%arg0: i32) -> (i32, i32) {
    %c0_i32 = arith.constant 0 : i32
    %c0_i32_0 = arith.constant 0 : i32
    %c0_i32_1 = arith.constant 0 : i32
    return %c0_i32, %c0_i32_0 : i32, i32
  }
  func.func @transform_7(%arg0: i32) -> (i32, i32) {
    %c0_i32 = arith.constant 0 : i32
    %c0_i32_0 = arith.constant 0 : i32
    return %arg0, %c0_i32 : i32, i32
  }
}

</mosaic_0001>

<llo_original>
// kernel: fractional_mlp_forward.1
$region0: #{fractional_mlp_forward.1}
  #allocation0 [shape = 'u32[]', space=smem, size = 0x4, offset = 0x4, fixed_abs, tag = 'smem constant byte address 0x4 - core index']
  #allocation1 [shape = 'u32[72,128]{1,0:T(1,128)}', space=vmem, size = 0x9000, scoped, tag = 'internal scratch']
  %s0 = inlined_call_operand.vmem [shape: f32[16,784], index: 0, kind: input, shape index: {}]
  %s1 = inlined_call_operand.vmem [shape: f32[784,128], index: 1, kind: input, shape index: {}]
  %s2 = inlined_call_operand.vmem [shape: f32[1,128], index: 2, kind: input, shape index: {}]
  %s3 = inlined_call_operand.vmem [shape: f32[128,64], index: 3, kind: input, shape index: {}]
  %s4 = inlined_call_operand.vmem [shape: f32[1,64], index: 4, kind: input, shape index: {}]
  %s5 = inlined_call_operand.vmem [shape: f32[64,128], index: 5, kind: input, shape index: {}]
  %s6 = inlined_call_operand.vmem [shape: f32[1,128], index: 6, kind: input, shape index: {}]
  %s7 = inlined_call_operand.hbm [shape: f32[16,128], index: 7, kind: output, shape index: {}]
  %s8 = sld [smem:[#allocation0]]
  $region38: #{fractional_mlp_forward.1} parent=0
    _
  %s10 = ssub.s32 1, %s8
  %s11 = scalar_select 0, %s10, %s8
  $region1: #{fractional_mlp_forward.1} parent=0
    #allocation2 [shape = 'u8[8192]{0}', space=vmem, size = 0x2000, scoped, tag = 'output window, operand 0, single buffered']
    #allocation3 [shape = 's32[1]{0}', space=sflag, size = 0x4, scoped, tag = 'scoped memory for fractional_mlp_forward.1']
    %12 = vsyncpa [#allocation3], 0
    // Predicated region
    $region2: #{fractional_mlp_forward.1} parent=1 // pred_check
      _
    $region3: #{fractional_mlp_forward.1} parent=1 // pred_check_branch
      %14 = sbr.rel (0) target = $region5
    $region4: #{fractional_mlp_forward.1} parent=1 // pred_region
      _
    $region5: #{fractional_mlp_forward.1} parent=1 // pred_fallthru
      _
    // Predicated region
    $region6: #{fractional_mlp_forward.1} parent=1 // pred_check
      _
    $region7: #{fractional_mlp_forward.1} parent=1 // pred_check_branch
      %16 = sbr.rel (0) target = $region9
    $region8: #{fractional_mlp_forward.1} parent=1 // pred_region
      _
    $region9: #{fractional_mlp_forward.1} parent=1 // pred_fallthru
      _
    // Predicated region
    $region10: #{fractional_mlp_forward.1} parent=1 // pred_check
      _
    $region11: #{fractional_mlp_forward.1} parent=1 // pred_check_branch
      %18 = sbr.rel (0) target = $region13
    $region12: #{fractional_mlp_forward.1} parent=1 // pred_region
      _
    $region13: #{fractional_mlp_forward.1} parent=1 // pred_fallthru
      _
    // Predicated region
    $region14: #{fractional_mlp_forward.1} parent=1 // pred_check
      _
    $region15: #{fractional_mlp_forward.1} parent=1 // pred_check_branch
      %20 = sbr.rel (0) target = $region17
    $region16: #{fractional_mlp_forward.1} parent=1 // pred_region
      _
    $region17: #{fractional_mlp_forward.1} parent=1 // pred_fallthru
      _
    // Predicated region
    $region18: #{fractional_mlp_forward.1} parent=1 // pred_check
      _
    $region19: #{fractional_mlp_forward.1} parent=1 // pred_check_branch
      %22 = sbr.rel (0) target = $region21
    $region20: #{fractional_mlp_forward.1} parent=1 // pred_region
      _
    $region21: #{fractional_mlp_forward.1} parent=1 // pred_fallthru
      _
    // Predicated region
    $region22: #{fractional_mlp_forward.1} parent=1 // pred_check
      _
    $region23: #{fractional_mlp_forward.1} parent=1 // pred_check_branch
      %24 = sbr.rel (0) target = $region25
    $region24: #{fractional_mlp_forward.1} parent=1 // pred_region
      _
    $region25: #{fractional_mlp_forward.1} parent=1 // pred_fallthru
      _
    // Predicated region
    $region26: #{fractional_mlp_forward.1} parent=1 // pred_check
      _
    $region27: #{fractional_mlp_forward.1} parent=1 // pred_check_branch
      %26 = sbr.rel (0) target = $region29
    $region28: #{fractional_mlp_forward.1} parent=1 // pred_region
      _
    $region29: #{fractional_mlp_forward.1} parent=1 // pred_fallthru
      _
    %v27 = vld [vmem:[%s0] sm:$0xff]
    %v28 = vld [vmem:[%s0 + $0x8] sm:$0xff]
    %v29 = vld [vmem:[%s0 + $0x10] sm:$0xff]
    %v30 = vld [vmem:[%s0 + $0x18] sm:$0xff]
    %v31 = vld [vmem:[%s0 + $0x20] sm:$0xff]
    %v32 = vld [vmem:[%s0 + $0x28] sm:$0xff]
    %v33 = vld [vmem:[%s0 + $0x30] sm:$0xff]
    %v34 = vld [vmem:[%s0 + $0x38] sm:$0xff]
    %v35 = vld [vmem:[%s0 + $0x40] sm:$0xff]
    %v36 = vld [vmem:[%s0 + $0x48] sm:$0xff]
    %v37 = vld [vmem:[%s0 + $0x50] sm:$0xff]
    %v38 = vld [vmem:[%s0 + $0x58] sm:$0xff]
    %v39 = vld [vmem:[%s0 + $0x60] sm:$0xff]
    %v40 = vld [vmem:[%s0 + $0x68] sm:$0xff]
    %v41 = vld [vmem:[%s1] sm:$0xff]
    %v42 = vld [vmem:[%s1 + $0x8] sm:$0xff]
    %v43 = vld [vmem:[%s1 + $0x10] sm:$0xff]
    %v44 = vld [vmem:[%s1 + $0x18] sm:$0xff]
    %v45 = vld [vmem:[%s1 + $0x20] sm:$0xff]
    %v46 = vld [vmem:[%s1 + $0x28] sm:$0xff]
    %v47 = vld [vmem:[%s1 + $0x30] sm:$0xff]
    %v48 = vld [vmem:[%s1 + $0x38] sm:$0xff]
    %v49 = vld [vmem:[%s1 + $0x40] sm:$0xff]
    %v50 = vld [vmem:[%s1 + $0x48] sm:$0xff]
    %v51 = vld [vmem:[%s1 + $0x50] sm:$0xff]
    %v52 = vld [vmem:[%s1 + $0x58] sm:$0xff]
    %v53 = vld [vmem:[%s1 + $0x60] sm:$0xff]
    %v54 = vld [vmem:[%s1 + $0x68] sm:$0xff]
    %v55 = vld [vmem:[%s1 + $0x70] sm:$0xff]
    %v56 = vld [vmem:[%s1 + $0x78] sm:$0xff]
    %v57 = vld [vmem:[%s1 + $0x80] sm:$0xff]
    %v58 = vld [vmem:[%s1 + $0x88] sm:$0xff]
    %v59 = vld [vmem:[%s1 + $0x90] sm:$0xff]
    %v60 = vld [vmem:[%s1 + $0x98] sm:$0xff]
    %v61 = vld [vmem:[%s1 + $0xa0] sm:$0xff]
    %v62 = vld [vmem:[%s1 + $0xa8] sm:$0xff]
    %v63 = vld [vmem:[%s1 + $0xb0] sm:$0xff]
    %v64 = vld [vmem:[%s1 + $0xb8] sm:$0xff]
    %v65 = vld [vmem:[%s1 + $0xc0] sm:$0xff]
    %v66 = vld [vmem:[%s1 + $0xc8] sm:$0xff]
    %v67 = vld [vmem:[%s1 + $0xd0] sm:$0xff]
    %v68 = vld [vmem:[%s1 + $0xd8] sm:$0xff]
    %v69 = vld [vmem:[%s1 + $0xe0] sm:$0xff]
    %v70 = vld [vmem:[%s1 + $0xe8] sm:$0xff]
    %v71 = vld [vmem:[%s1 + $0xf0] sm:$0xff]
    %v72 = vld [vmem:[%s1 + $0xf8] sm:$0xff]
    %v73 = vld [vmem:[%s1 + $0x100] sm:$0xff]
    %v74 = vld [vmem:[%s1 + $0x108] sm:$0xff]
    %v75 = vld [vmem:[%s1 + $0x110] sm:$0xff]
    %v76 = vld [vmem:[%s1 + $0x118] sm:$0xff]
    %v77 = vld [vmem:[%s1 + $0x120] sm:$0xff]
    %v78 = vld [vmem:[%s1 + $0x128] sm:$0xff]
    %v79 = vld [vmem:[%s1 + $0x130] sm:$0xff]
    %v80 = vld [vmem:[%s1 + $0x138] sm:$0xff]
    %v81 = vld [vmem:[%s1 + $0x140] sm:$0xff]
    %v82 = vld [vmem:[%s1 + $0x148] sm:$0xff]
    %v83 = vld [vmem:[%s1 + $0x150] sm:$0xff]
    %v84 = vld [vmem:[%s1 + $0x158] sm:$0xff]
    %v85 = vld [vmem:[%s1 + $0x160] sm:$0xff]
    %v86 = vld [vmem:[%s1 + $0x168] sm:$0xff]
    %v87 = vld [vmem:[%s1 + $0x170] sm:$0xff]
    %v88 = vld [vmem:[%s1 + $0x178] sm:$0xff]
    %v89 = vld [vmem:[%s1 + $0x180] sm:$0xff]
    %v90 = vld [vmem:[%s1 + $0x188] sm:$0xff]
    %v91 = vld [vmem:[%s1 + $0x190] sm:$0xff]
    %v92 = vld [vmem:[%s1 + $0x198] sm:$0xff]
    %v93 = vld [vmem:[%s1 + $0x1a0] sm:$0xff]
    %v94 = vld [vmem:[%s1 + $0x1a8] sm:$0xff]
    %v95 = vld [vmem:[%s1 + $0x1b0] sm:$0xff]
    %v96 = vld [vmem:[%s1 + $0x1b8] sm:$0xff]
    %v97 = vld [vmem:[%s1 + $0x1c0] sm:$0xff]
    %v98 = vld [vmem:[%s1 + $0x1c8] sm:$0xff]
    %v99 = vld [vmem:[%s1 + $0x1d0] sm:$0xff]
    %v100 = vld [vmem:[%s1 + $0x1d8] sm:$0xff]
    %v101 = vld [vmem:[%s1 + $0x1e0] sm:$0xff]
    %v102 = vld [vmem:[%s1 + $0x1e8] sm:$0xff]
    %v103 = vld [vmem:[%s1 + $0x1f0] sm:$0xff]
    %v104 = vld [vmem:[%s1 + $0x1f8] sm:$0xff]
    %v105 = vld [vmem:[%s1 + $0x200] sm:$0xff]
    %v106 = vld [vmem:[%s1 + $0x208] sm:$0xff]
    %v107 = vld [vmem:[%s1 + $0x210] sm:$0xff]
    %v108 = vld [vmem:[%s1 + $0x218] sm:$0xff]
    %v109 = vld [vmem:[%s1 + $0x220] sm:$0xff]
    %v110 = vld [vmem:[%s1 + $0x228] sm:$0xff]
    %v111 = vld [vmem:[%s1 + $0x230] sm:$0xff]
    %v112 = vld [vmem:[%s1 + $0x238] sm:$0xff]
    %v113 = vld [vmem:[%s1 + $0x240] sm:$0xff]
    %v114 = vld [vmem:[%s1 + $0x248] sm:$0xff]
    %v115 = vld [vmem:[%s1 + $0x250] sm:$0xff]
    %v116 = vld [vmem:[%s1 + $0x258] sm:$0xff]
    %v117 = vld [vmem:[%s1 + $0x260] sm:$0xff]
    %v118 = vld [vmem:[%s1 + $0x268] sm:$0xff]
    %v119 = vld [vmem:[%s1 + $0x270] sm:$0xff]
    %v120 = vld [vmem:[%s1 + $0x278] sm:$0xff]
    %v121 = vld [vmem:[%s1 + $0x280] sm:$0xff]
    %v122 = vld [vmem:[%s1 + $0x288] sm:$0xff]
    %v123 = vld [vmem:[%s1 + $0x290] sm:$0xff]
    %v124 = vld [vmem:[%s1 + $0x298] sm:$0xff]
    %v125 = vld [vmem:[%s1 + $0x2a0] sm:$0xff]
    %v126 = vld [vmem:[%s1 + $0x2a8] sm:$0xff]
    %v127 = vld [vmem:[%s1 + $0x2b0] sm:$0xff]
    %v128 = vld [vmem:[%s1 + $0x2b8] sm:$0xff]
    %v129 = vld [vmem:[%s1 + $0x2c0] sm:$0xff]
    %v130 = vld [vmem:[%s1 + $0x2c8] sm:$0xff]
    %v131 = vld [vmem:[%s1 + $0x2d0] sm:$0xff]
    %v132 = vld [vmem:[%s1 + $0x2d8] sm:$0xff]
    %v133 = vld [vmem:[%s1 + $0x2e0] sm:$0xff]
    %v134 = vld [vmem:[%s1 + $0x2e8] sm:$0xff]
    %v135 = vld [vmem:[%s1 + $0x2f0] sm:$0xff]
    %v136 = vld [vmem:[%s1 + $0x2f8] sm:$0xff]
    %v137 = vld [vmem:[%s1 + $0x300] sm:$0xff]
    %v138 = vld [vmem:[%s1 + $0x308] sm:$0xff]
    %v139 = vld [vmem:[%s2] sm:$0x1]
    %v141 = vperm.slane %v139, 0
    %vm143 = vcmask 130048
    %v145 = vsel %vm143, %v33, 0
    %v148 = vsel %vm143, %v40, 0
    %150 = vmatpush.msra.mxu0 %v56
    %151 = vmatpush.msra.mxu0 %v55
    %152 = vmatpush.msra.mxu0 %v54
    %153 = vmatpush.msra.mxu0 %v53
    %154 = vmatpush.msra.mxu0 %v52
    %155 = vmatpush.msra.mxu0 %v51
    %156 = vmatpush.msra.mxu0 %v50
    %157 = vmatpush.msra.mxu0 %v49
    %158 = vmatpush.msra.mxu0 %v48
    %159 = vmatpush.msra.mxu0 %v47
    %160 = vmatpush.msra.mxu0 %v46
    %161 = vmatpush.msra.mxu0 %v45
    %162 = vmatpush.msra.mxu0 %v44
    %163 = vmatpush.msra.mxu0 %v43
    %164 = vmatpush.msra.mxu0 %v42
    %165 = vmatpush.msra.mxu0 %v41
    %166 = vmatmul.f32.gmra.mxu0 %v27
    %v167 = vpop.f32.mrf.mxu0
    %v168 = vadd.f32 %v141, %v167
    %169 = vmatmul.f32.gmra.mxu0 %v34
    %v170 = vpop.f32.mrf.mxu0
    %v171 = vadd.f32 %v141, %v170
    %172 = vdwg.mxu0
    %173 = vmatpush.msra.mxu0 %v72
    %174 = vmatpush.msra.mxu0 %v71
    %175 = vmatpush.msra.mxu0 %v70
    %176 = vmatpush.msra.mxu0 %v69
    %177 = vmatpush.msra.mxu0 %v68
    %178 = vmatpush.msra.mxu0 %v67
    %179 = vmatpush.msra.mxu0 %v66
    %180 = vmatpush.msra.mxu0 %v65
    %181 = vmatpush.msra.mxu0 %v64
    %182 = vmatpush.msra.mxu0 %v63
    %183 = vmatpush.msra.mxu0 %v62
    %184 = vmatpush.msra.mxu0 %v61
    %185 = vmatpush.msra.mxu0 %v60
    %186 = vmatpush.msra.mxu0 %v59
    %187 = vmatpush.msra.mxu0 %v58
    %188 = vmatpush.msra.mxu0 %v57
    %189 = vmatmul.f32.gmra.mxu0 %v28
    %v190 = vpop.f32.mrf.mxu0
    %v191 = vadd.f32 %v168, %v190
    %192 = vmatmul.f32.gmra.mxu0 %v35
    %v193 = vpop.f32.mrf.mxu0
    %v194 = vadd.f32 %v171, %v193
    %195 = vdwg.mxu0
    %196 = vmatpush.msra.mxu0 %v88
    %197 = vmatpush.msra.mxu0 %v87
    %198 = vmatpush.msra.mxu0 %v86
    %199 = vmatpush.msra.mxu0 %v85
    %200 = vmatpush.msra.mxu0 %v84
    %201 = vmatpush.msra.mxu0 %v83
    %202 = vmatpush.msra.mxu0 %v82
    %203 = vmatpush.msra.mxu0 %v81
    %204 = vmatpush.msra.mxu0 %v80
    %205 = vmatpush.msra.mxu0 %v79
    %206 = vmatpush.msra.mxu0 %v78
    %207 = vmatpush.msra.mxu0 %v77
    %208 = vmatpush.msra.mxu0 %v76
    %209 = vmatpush.msra.mxu0 %v75
    %210 = vmatpush.msra.mxu0 %v74
    %211 = vmatpush.msra.mxu0 %v73
    %212 = vmatmul.f32.gmra.mxu0 %v29
    %v213 = vpop.f32.mrf.mxu0
    %v214 = vadd.f32 %v191, %v213
    %215 = vmatmul.f32.gmra.mxu0 %v36
    %v216 = vpop.f32.mrf.mxu0
    %v217 = vadd.f32 %v194, %v216
    %218 = vdwg.mxu0
    %219 = vmatpush.msra.mxu0 %v104
    %220 = vmatpush.msra.mxu0 %v103
    %221 = vmatpush.msra.mxu0 %v102
    %222 = vmatpush.msra.mxu0 %v101
    %223 = vmatpush.msra.mxu0 %v100
    %224 = vmatpush.msra.mxu0 %v99
    %225 = vmatpush.msra.mxu0 %v98
    %226 = vmatpush.msra.mxu0 %v97
    %227 = vmatpush.msra.mxu0 %v96
    %228 = vmatpush.msra.mxu0 %v95
    %229 = vmatpush.msra.mxu0 %v94
    %230 = vmatpush.msra.mxu0 %v93
    %231 = vmatpush.msra.mxu0 %v92
    %232 = vmatpush.msra.mxu0 %v91
    %233 = vmatpush.msra.mxu0 %v90
    %234 = vmatpush.msra.mxu0 %v89
    %235 = vmatmul.f32.gmra.mxu0 %v30
    %v236 = vpop.f32.mrf.mxu0
    %v237 = vadd.f32 %v214, %v236
    %238 = vmatmul.f32.gmra.mxu0 %v37
    %v239 = vpop.f32.mrf.mxu0
    %v240 = vadd.f32 %v217, %v239
    %241 = vdwg.mxu0
    %242 = vmatpush.msra.mxu0 %v120
    %243 = vmatpush.msra.mxu0 %v119
    %244 = vmatpush.msra.mxu0 %v118
    %245 = vmatpush.msra.mxu0 %v117
    %246 = vmatpush.msra.mxu0 %v116
    %247 = vmatpush.msra.mxu0 %v115
    %248 = vmatpush.msra.mxu0 %v114
    %249 = vmatpush.msra.mxu0 %v113
    %250 = vmatpush.msra.mxu0 %v112
    %251 = vmatpush.msra.mxu0 %v111
    %252 = vmatpush.msra.mxu0 %v110
    %253 = vmatpush.msra.mxu0 %v109
    %254 = vmatpush.msra.mxu0 %v108
    %255 = vmatpush.msra.mxu0 %v107
    %256 = vmatpush.msra.mxu0 %v106
    %257 = vmatpush.msra.mxu0 %v105
    %258 = vmatmul.f32.gmra.mxu0 %v31
    %v259 = vpop.f32.mrf.mxu0
    %v260 = vadd.f32 %v237, %v259
    %261 = vmatmul.f32.gmra.mxu0 %v38
    %v262 = vpop.f32.mrf.mxu0
    %v263 = vadd.f32 %v240, %v262
    %264 = vdwg.mxu0
    %265 = vmatpush.msra.mxu0 %v136
    %266 = vmatpush.msra.mxu0 %v135
    %267 = vmatpush.msra.mxu0 %v134
    %268 = vmatpush.msra.mxu0 %v133
    %269 = vmatpush.msra.mxu0 %v132
    %270 = vmatpush.msra.mxu0 %v131
    %271 = vmatpush.msra.mxu0 %v130
    %272 = vmatpush.msra.mxu0 %v129
    %273 = vmatpush.msra.mxu0 %v128
    %274 = vmatpush.msra.mxu0 %v127
    %275 = vmatpush.msra.mxu0 %v126
    %276 = vmatpush.msra.mxu0 %v125
    %277 = vmatpush.msra.mxu0 %v124
    %278 = vmatpush.msra.mxu0 %v123
    %279 = vmatpush.msra.mxu0 %v122
    %280 = vmatpush.msra.mxu0 %v121
    %281 = vmatmul.f32.gmra.mxu0 %v32
    %v282 = vpop.f32.mrf.mxu0
    %v283 = vadd.f32 %v260, %v282
    %284 = vmatmul.f32.gmra.mxu0 %v39
    %v285 = vpop.f32.mrf.mxu0
    %v286 = vadd.f32 %v263, %v285
    %287 = vdwg.mxu0
    %288 = vmatpush.msra.mxu0 0.0
    %289 = vmatpush.msra.mxu0 0.0
    %290 = vmatpush.msra.mxu0 0.0
    %291 = vmatpush.msra.mxu0 0.0
    %292 = vmatpush.msra.mxu0 0.0
    %293 = vmatpush.msra.mxu0 0.0
    %294 = vmatpush.msra.mxu0 0.0
    %295 = vmatpush.msra.mxu0 0.0
    %296 = vmatpush.msra.mxu0 0.0
    %297 = vmatpush.msra.mxu0 0.0
    %298 = vmatpush.msra.mxu0 0.0
    %299 = vmatpush.msra.mxu0 0.0
    %300 = vmatpush.msra.mxu0 0.0
    %301 = vmatpush.msra.mxu0 0.0
    %302 = vmatpush.msra.mxu0 %v138
    %303 = vmatpush.msra.mxu0 %v137
    %304 = vmatmul.f32.gmra.mxu0 %v145
    %v305 = vpop.f32.mrf.mxu0
    %v306 = vadd.f32 %v283, %v305
    %307 = vmatmul.f32.gmra.mxu0 %v148
    %v308 = vpop.f32.mrf.mxu0
    %v309 = vadd.f32 %v286, %v308
    %310 = vdwg.mxu0
    %v311 = vmax.f32 %v306, 0.0
    %v312 = vmax.f32 %v309, 0.0
    %v313 = vld [vmem:[%s3] sm:$0xff]
    %v314 = vld [vmem:[%s3 + $0x8] sm:$0xff]
    %v315 = vld [vmem:[%s3 + $0x10] sm:$0xff]
    %v316 = vld [vmem:[%s3 + $0x18] sm:$0xff]
    %v317 = vld [vmem:[%s3 + $0x20] sm:$0xff]
    %v318 = vld [vmem:[%s3 + $0x28] sm:$0xff]
    %v319 = vld [vmem:[%s3 + $0x30] sm:$0xff]
    %v320 = vld [vmem:[%s3 + $0x38] sm:$0xff]
    %v321 = vld [vmem:[%s3 + $0x40] sm:$0xff]
    %v322 = vld [vmem:[%s3 + $0x48] sm:$0xff]
    %v323 = vld [vmem:[%s3 + $0x50] sm:$0xff]
    %v324 = vld [vmem:[%s3 + $0x58] sm:$0xff]
    %v325 = vld [vmem:[%s3 + $0x60] sm:$0xff]
    %v326 = vld [vmem:[%s3 + $0x68] sm:$0xff]
    %v327 = vld [vmem:[%s3 + $0x70] sm:$0xff]
    %v328 = vld [vmem:[%s3 + $0x78] sm:$0xff]
    %v329 = vld [vmem:[%s4] sm:$0x1]
    %v331 = vperm.slane %v329, 0
    %333 = vmatpush.msra.mxu0 %v328
    %334 = vmatpush.msra.mxu0 %v327
    %335 = vmatpush.msra.mxu0 %v326
    %336 = vmatpush.msra.mxu0 %v325
    %337 = vmatpush.msra.mxu0 %v324
    %338 = vmatpush.msra.mxu0 %v323
    %339 = vmatpush.msra.mxu0 %v322
    %340 = vmatpush.msra.mxu0 %v321
    %341 = vmatpush.msra.mxu0 %v320
    %342 = vmatpush.msra.mxu0 %v319
    %343 = vmatpush.msra.mxu0 %v318
    %344 = vmatpush.msra.mxu0 %v317
    %345 = vmatpush.msra.mxu0 %v316
    %346 = vmatpush.msra.mxu0 %v315
    %347 = vmatpush.msra.mxu0 %v314
    %348 = vmatpush.msra.mxu0 %v313
    %349 = vmatmul.f32.gmra.mxu0 %v311
    %v350 = vpop.f32.mrf.mxu0
    %v351 = vadd.f32 %v331, %v350
    %352 = vmatmul.f32.gmra.mxu0 %v312
    %v353 = vpop.f32.mrf.mxu0
    %v354 = vadd.f32 %v331, %v353
    %355 = vdwg.mxu0
    %v356 = vmax.f32 %v351, 0.0
    %v357 = vmax.f32 %v354, 0.0
    %v358 = vld [vmem:[%s5] sm:$0xff]
    %v359 = vld [vmem:[%s5 + $0x8] sm:$0xff]
    %v360 = vld [vmem:[%s5 + $0x10] sm:$0xff]
    %v361 = vld [vmem:[%s5 + $0x18] sm:$0xff]
    %v362 = vld [vmem:[%s5 + $0x20] sm:$0xff]
    %v363 = vld [vmem:[%s5 + $0x28] sm:$0xff]
    %v364 = vld [vmem:[%s5 + $0x30] sm:$0xff]
    %v365 = vld [vmem:[%s5 + $0x38] sm:$0xff]
    %v366 = vld [vmem:[%s6] sm:$0x1]
    %v368 = vperm.slane %v366, 0
    %vm370 = vcmask 523264
    %v372 = vsel %vm370, %v356, 0
    %v375 = vsel %vm370, %v357, 0
    %377 = vmatpush.msra.mxu0 0.0
    %378 = vmatpush.msra.mxu0 0.0
    %379 = vmatpush.msra.mxu0 0.0
    %380 = vmatpush.msra.mxu0 0.0
    %381 = vmatpush.msra.mxu0 0.0
    %382 = vmatpush.msra.mxu0 0.0
    %383 = vmatpush.msra.mxu0 0.0
    %384 = vmatpush.msra.mxu0 0.0
    %385 = vmatpush.msra.mxu0 %v365
    %386 = vmatpush.msra.mxu0 %v364
    %387 = vmatpush.msra.mxu0 %v363
    %388 = vmatpush.msra.mxu0 %v362
    %389 = vmatpush.msra.mxu0 %v361
    %390 = vmatpush.msra.mxu0 %v360
    %391 = vmatpush.msra.mxu0 %v359
    %392 = vmatpush.msra.mxu0 %v358
    %393 = vmatmul.f32.gmra.mxu0 %v372
    %v394 = vpop.f32.mrf.mxu0
    %v395 = vadd.f32 %v368, %v394
    %396 = vmatmul.f32.gmra.mxu0 %v375
    %v397 = vpop.f32.mrf.mxu0
    %v398 = vadd.f32 %v368, %v397
    %399 = vdwg.mxu0
    %400 = vst [vmem:[#allocation2] sm:$0xff] %v395
    %401 = vst [vmem:[#allocation2 + $0x8] sm:$0xff] %v398
    // Predicated region
    $region30: #{fractional_mlp_forward.1} parent=1 // pred_check
      _
    $region31: #{fractional_mlp_forward.1} parent=1 // pred_check_branch
      %403 = sbr.rel (0) target = $region33
    $region32: #{fractional_mlp_forward.1} parent=1 // pred_region
      %405 = vsyncadd [#allocation3], 0
      %s406 = sshll.u32 [#allocation2], 4
      %s407 = int_to_ptr.vmem [resolvable:$true] %s406
      %s408 = sshll.u32 %s7, 4
      %s409 = int_to_ptr.hbm [resolvable:$true] %s408
      %414 = dma.vmem_to_hbm [thread:$0]  %s407, 256, %s409, [#allocation3], 128, 128, 8
    $region33: #{fractional_mlp_forward.1} parent=1 // pred_fallthru
      _
    // Predicated region
    $region34: #{fractional_mlp_forward.1} parent=1 // pred_check
      _
    $region35: #{fractional_mlp_forward.1} parent=1 // pred_check_branch
      %416 = sbr.rel (0) target = $region37
    $region36: #{fractional_mlp_forward.1} parent=1 // pred_region
      %418 = dma.done [#allocation3], 256
    $region37: #{fractional_mlp_forward.1} parent=1 // pred_fallthru
      _
    %419 = vsyncpa [#allocation3], 1

</llo_original>
